<compile_context>
chip_gen: v6e
topology: v6e:2x2x1
jax: 0.10.0
libtpu: 0.0.40
codegen_flags: <defaults>
</compile_context>

<pallas_src>
import functools

import jax
import jax.numpy as jnp
from jax import lax
from jax.experimental import pallas as pl
from jax.experimental.pallas import tpu as pltpu

_LANE = 128
_SUBLANE = 8
_MAX_BLOCK_COLS = 2048                 # lanes per tile (multiple of 128)
_TILE_BUDGET_BYTES = 4 * 1024 * 1024   # per tile; x4 for in+out double-buffered
_VMEM_LIMIT_BYTES = 32 * 1024 * 1024   # safe on v5e / v6e / v7x


def _moth_relu_kernel(x_ref, o_ref, *, channels: int, abs_channels: int):
    x = x_ref[...]
    block_rows = x_ref.shape[0]
    # Per-row mask on a (block_rows, 1) column only; lane broadcast is free.
    rows = (pl.program_id(0) * block_rows
            + lax.broadcasted_iota(jnp.int32, (block_rows, 1), 0))
    channel = rows % channels
    neg_scale = jnp.where(channel < abs_channels, -1.0, 0.0).astype(x.dtype)
    # abs(x) = max(x, -x); relu(x) = max(x, 0)  ->  one vmul + one vmax.
    o_ref[...] = jnp.maximum(x, x * neg_scale)


def moth_relu_2d(x: jax.Array, abs_channels) -> jax.Array:
    """Pallas implementation of MothReLU2d.forward for NCHW input."""
    n, c, h, w = x.shape
    if isinstance(abs_channels, float):
        abs_c = int(abs_channels * c)
    else:
        abs_c = int(abs_channels)

    hw = h * w
    nc = n * c
    x_flat = x.reshape(nc, hw)

    itemsize = jnp.dtype(x.dtype).itemsize
    packing = max(1, 4 // itemsize)        # 1 for f32, 2 for bf16, 4 for int8
    row_align = _SUBLANE * packing         # full packed sublane group

    # Column block: large multiple of 128 (lane-dense stores); full extent
    # only when H*W < 128 (tail blocks for non-multiple-of-128 H*W are masked).
    if hw >= _LANE:
        block_cols = min(_MAX_BLOCK_COLS, (hw // _LANE) * _LANE)
    else:
        block_cols = hw

    # Row block: largest sublane-aligned tile within the per-tile VMEM budget.
    if nc >= row_align:
        rows_fit = _TILE_BUDGET_BYTES // (block_cols * itemsize)
        rows_fit = max(row_align, (rows_fit // row_align) * row_align)
        block_rows = min(rows_fit, (nc // row_align) * row_align)
    else:
        block_rows = nc                    # tiny input: full extent

    # Prefer >= 2 grid steps so v7x's second TensorCore gets work.
    if (pl.cdiv(nc, block_rows) * pl.cdiv(hw, block_cols) == 1
            and block_rows > row_align):
        block_rows = max(row_align, ((block_rows // 2) // row_align) * row_align)

    grid = (pl.cdiv(nc, block_rows), pl.cdiv(hw, block_cols))

    kernel = functools.partial(_moth_relu_kernel, channels=c, abs_channels=abs_c)

    out_flat = pl.pallas_call(
        kernel,
        out_shape=jax.ShapeDtypeStruct((nc, hw), x.dtype),
        grid_spec=pl.GridSpec(
            grid=grid,
            in_specs=[pl.BlockSpec((block_rows, block_cols),
                                   lambda i, j: (i, j))],
            out_specs=pl.BlockSpec((block_rows, block_cols),
                                   lambda i, j: (i, j)),
        ),
        compiler_params=pltpu.CompilerParams(
            dimension_semantics=("parallel", "parallel"),
            vmem_limit_bytes=_VMEM_LIMIT_BYTES),
    )(x_flat)

    return out_flat.reshape(n, c, h, w)


def _reference(x: jax.Array, abs_channels) -> jax.Array:
    n, c, h, w = x.shape
    if isinstance(abs_channels, float):
        abs_c = int(abs_channels * c)
    else:
        abs_c = int(abs_channels)
    abs_part = jnp.abs(x[:, :abs_c])
    relu_part = jnp.maximum(x[:, abs_c:], 0)
    return jnp.concatenate([abs_part, relu_part], axis=1)


if __name__ == "__main__":
    # Primary case: (2, 4, 16, 16) f32, float ratio abs_channels.
    x = jax.random.normal(jax.random.PRNGKey(0), (2, 4, 16, 16),
                          dtype=jnp.float32)
    abs_channels = 0.5  # -> int(0.5 * 4) = 2 abs channels
    out = jax.block_until_ready(moth_relu_2d(x, abs_channels))
    ref = _reference(x, abs_channels)
    assert out.shape == x.shape and out.dtype == x.dtype
    assert jnp.allclose(out, ref, atol=1e-6, rtol=1e-6), "mismatch vs reference"

    # Ragged case: N*C not a multiple of 8, H*W not a multiple of 128
    # (exercises the cdiv partial-block path that replaced the grid=1 fallback).
    x2 = jax.random.normal(jax.random.PRNGKey(1), (3, 3, 7, 7),
                           dtype=jnp.float32)
    out2 = jax.block_until_ready(moth_relu_2d(x2, 2))
    ref2 = _reference(x2, 2)
    assert jnp.allclose(out2, ref2, atol=1e-6, rtol=1e-6), "ragged mismatch"

    print("KERNEL_OK")
</pallas_src>

<mosaic_0001>
module attributes {stable_mosaic.version = 11 : i64} {
  func.func @_moth_relu_kernel(%arg0: i32, %arg1: i32, %arg2: memref<8x256xf32, #tpu.memory_space<vmem>>, %arg3: memref<8x256xf32, #tpu.memory_space<vmem>>) attributes {dimension_semantics = [#tpu.dimension_semantics<parallel>, #tpu.dimension_semantics<parallel>], iteration_bounds = array<i64: 1, 1>, scalar_prefetch = 0 : i64, scratch_operands = 0 : i64, tpu.core_type = #tpu.core_type<tc>, window_params = [{transform_indices = @transform_0, window_bounds = array<i64: 8, 256>}, {transform_indices = @transform_1, window_bounds = array<i64: 8, 256>}]} {
    %c0 = arith.constant 0 : index
    %c0_0 = arith.constant 0 : index
    %0 = vector.load %arg2[%c0, %c0_0] : memref<8x256xf32, #tpu.memory_space<vmem>>, vector<8x256xf32>
    %c8_i32 = arith.constant 8 : i32
    %1 = arith.muli %arg0, %c8_i32 : i32
    %2 = tpu.iota {dimensions = array<i32: 0>} : vector<8x1xi32>
    %3 = vector.broadcast %1 : i32 to vector<8x1xi32>
    %4 = arith.addi %3, %2 : vector<8x1xi32>
    %c4_i32 = arith.constant 4 : i32
    %c0_i32 = arith.constant 0 : i32
    %5 = arith.cmpi eq, %c4_i32, %c0_i32 : i32
    %c1_i32 = arith.constant 1 : i32
    %6 = arith.select %5, %c1_i32, %c4_i32 : i32
    %7 = vector.broadcast %6 : i32 to vector<8x1xi32>
    %8 = arith.remsi %4, %7 : vector<8x1xi32>
    %c0_i32_1 = arith.constant 0 : i32
    %9 = vector.broadcast %c0_i32_1 : i32 to vector<8x1xi32>
    %10 = arith.cmpi ne, %8, %9 : vector<8x1xi32>
    %c0_i32_2 = arith.constant 0 : i32
    %11 = vector.broadcast %c0_i32_2 : i32 to vector<8x1xi32>
    %12 = arith.cmpi slt, %8, %11 : vector<8x1xi32>
    %c0_i32_3 = arith.constant 0 : i32
    %13 = arith.cmpi slt, %6, %c0_i32_3 : i32
    %14 = vector.broadcast %13 : i1 to vector<8x1xi1>
    %15 = vector.broadcast %14 : vector<8x1xi1> to vector<8x1xi1>
    %16 = arith.xori %12, %15 : vector<8x1xi1>
    %17 = arith.andi %16, %10 : vector<8x1xi1>
    %18 = vector.broadcast %6 : i32 to vector<8x1xi32>
    %19 = arith.addi %8, %18 : vector<8x1xi32>
    %20 = arith.select %17, %19, %8 : vector<8x1xi1>, vector<8x1xi32>
    %c2_i32 = arith.constant 2 : i32
    %21 = vector.broadcast %c2_i32 : i32 to vector<8x1xi32>
    %22 = arith.cmpi slt, %20, %21 : vector<8x1xi32>
    %cst = arith.constant -1.000000e+00 : f32
    %cst_4 = arith.constant 0.000000e+00 : f32
    %23 = vector.broadcast %cst : f32 to vector<8x1xf32>
    %24 = vector.broadcast %cst_4 : f32 to vector<8x1xf32>
    %25 = arith.select %22, %23, %24 : vector<8x1xi1>, vector<8x1xf32>
    %26 = vector.broadcast %25 : vector<8x1xf32> to vector<8x256xf32>
    %27 = arith.mulf %0, %26 : vector<8x256xf32>
    %28 = arith.maximumf %0, %27 : vector<8x256xf32>
    %c0_5 = arith.constant 0 : index
    %c0_6 = arith.constant 0 : index
    %29 = vector.load %arg3[%c0_5, %c0_6] : memref<8x256xf32, #tpu.memory_space<vmem>>, vector<8x256xf32>
    tpu.vector_store %arg3[%c0_5, %c0_6], %28 {strides = array<i32>} : memref<8x256xf32, #tpu.memory_space<vmem>>, vector<8x256xf32>,
    return
  }
  func.func @transform_0(%arg0: i32, %arg1: i32) -> (i32, i32) {
    %c0_i32 = arith.constant 0 : i32
    return %arg0, %arg1 : i32, i32
  }
  func.func @transform_1(%arg0: i32, %arg1: i32) -> (i32, i32) {
    %c0_i32 = arith.constant 0 : i32
    return %arg0, %arg1 : i32, i32
  }
}

</mosaic_0001>

<llo_original>
// kernel: tpu_custom_call.1
$region0: #{tpu_custom_call.1}
  #allocation0 [shape = 'u32[]', space=smem, size = 0x4, offset = 0x4, fixed_abs, tag = 'smem constant byte address 0x4 - core index']
  #allocation1 [shape = 'u32[144,128]{1,0:T(1,128)}', space=vmem, size = 0x12000, scoped, tag = 'internal scratch']
  %s0 = inlined_call_operand.hbm [shape: f32[8,256], index: 0, kind: input, shape index: {}]
  %s1 = inlined_call_operand.hbm [shape: f32[8,256], index: 1, kind: output, shape index: {}]
  %s2 = sld [smem:[#allocation0]]
  $region18: #{tpu_custom_call.1} parent=0
    _
  %s4 = ssub.s32 1, %s2
  %s5 = scalar_select 0, %s4, %s2
  $region1: #{tpu_custom_call.1} parent=0
    #allocation2 [shape = 'u8[8192]{0}', space=vmem, size = 0x2000, scoped, tag = 'input window, operand 0, single buffered']
    #allocation3 [shape = 's32[1]{0}', space=sflag, size = 0x4, scoped, tag = 'scoped memory for tpu_custom_call.1']
    #allocation4 [shape = 's32[1]{0}', space=sflag, size = 0x4, scoped, tag = 'scoped memory for tpu_custom_call.1']
    #allocation5 [shape = 'u8[8192]{0}', space=vmem, size = 0x2000, scoped, tag = 'output window, operand 0, single buffered']
    %6 = vsyncpa [#allocation3], 0
    %7 = vsyncpa [#allocation4], 0
    // Predicated region
    $region2: #{tpu_custom_call.1} parent=1 // pred_check
      _
    $region3: #{tpu_custom_call.1} parent=1 // pred_check_branch
      %9 = sbr.rel (0) target = $region5
    $region4: #{tpu_custom_call.1} parent=1 // pred_region
      %s11 = ssub.s32 256, 256
      %12 = vsyncadd [#allocation3], %s11
      %s14 = sshll.u32 [#allocation2], 4
      %s15 = int_to_ptr.vmem [resolvable:$true] %s14
      %17 = dma.hbm_to_vmem [thread:$0]  %s0, 256, %s15, [#allocation3]
    $region5: #{tpu_custom_call.1} parent=1 // pred_fallthru
      _
    // Predicated region
    $region6: #{tpu_custom_call.1} parent=1 // pred_check
      _
    $region7: #{tpu_custom_call.1} parent=1 // pred_check_branch
      %19 = sbr.rel (0) target = $region9
    $region8: #{tpu_custom_call.1} parent=1 // pred_region
      %20 = dma.done [#allocation3], 256
    $region9: #{tpu_custom_call.1} parent=1 // pred_fallthru
      _
    %v21 = vld [vmem:[#allocation2] sm:$0xff]
    %v22 = vld [vmem:[#allocation2 + $0x8] sm:$0xff]
    %s23 = smul.u32 0, 8
    %v24 = vlaneseq
    %v25 = vshrl.u32 %v24, 7
    %v26 = vstv %s23
    %v27 = vadd.s32 %v26, %v25
    %vm28 = vcmp.lt.s32.totalorder %v27, 0
    %v29 = vsub.s32 0, %v27
    %v30 = vsel %vm28, %v29, %v27
    %v31 = vshrl.u32 %v30, 2
    %v32 = vand.u32 %v30, 3
    %v33 = vsub.s32 0, %v32
    %v34 = vsel %vm28, %v33, %v32
    %vm35 = vcmp.ne.s32.totalorder %v34, 0
    %vm36 = vcmp.lt.s32.totalorder %v34, 0
    %vm37 = vmand %vm36, %vm35
    %v38 = vadd.s32 %v34, 4
    %v39 = vsel %vm37, %v38, %v34
    %vm40 = vcmp.lt.s32.totalorder %v39, 2
    %v41 = vsel %vm40, -1.0, 0.0
    %v42 = vmul.f32 %v21, %v41
    %v43 = vmul.f32 %v22, %v41
    %v44 = vmax.f32 %v21, %v42
    %v45 = vmax.f32 %v22, %v43
    %46 = vst [vmem:[#allocation5] sm:$0xff] %v44
    %47 = vst [vmem:[#allocation5 + $0x8] sm:$0xff] %v45
    // Predicated region
    $region10: #{tpu_custom_call.1} parent=1 // pred_check
      _
    $region11: #{tpu_custom_call.1} parent=1 // pred_check_branch
      %49 = sbr.rel (0) target = $region13
    $region12: #{tpu_custom_call.1} parent=1 // pred_region
      %s51 = ssub.s32 256, 256
      %52 = vsyncadd [#allocation4], %s51
      %s54 = sshll.u32 [#allocation5], 4
      %s55 = int_to_ptr.vmem [resolvable:$true] %s54
      %57 = dma.vmem_to_hbm [thread:$0]  %s55, 256, %s1, [#allocation4]
    $region13: #{tpu_custom_call.1} parent=1 // pred_fallthru
      _
    // Predicated region
    $region14: #{tpu_custom_call.1} parent=1 // pred_check
      _
    $region15: #{tpu_custom_call.1} parent=1 // pred_check_branch
      %59 = sbr.rel (0) target = $region17
    $region16: #{tpu_custom_call.1} parent=1 // pred_region
      %60 = dma.done [#allocation4], 256
    $region17: #{tpu_custom_call.1} parent=1 // pred_fallthru
      _
    %61 = vsyncpa [#allocation3], 1
    %62 = vsyncpa [#allocation4], 1

</llo_original>
